<compile_context>
chip_gen: v6e
topology: v6e:2x2x1
jax: 0.10.0
libtpu: 0.0.40
codegen_flags: <defaults>
</compile_context>

<pallas_src>
import jax
import jax.numpy as jnp
from jax.experimental import pallas as pl
from jax.experimental.pallas import tpu as pltpu


def _round_up(x, m):
    return ((x + m - 1) // m) * m


def qnet_kernel(x_ref, w1b_ref, w2b_ref, o_ref):
    """relu(x @ w1 + b1) @ w2 + b2 for one batch tile, both layers on the MXU."""
    S_pad = w1b_ref.shape[0] - 1          # K of fc1 (padded to a multiple of 8)
    H = w1b_ref.shape[1]                  # hidden dim (128)
    mxu_dtype = w1b_ref.dtype             # f32 (exact) or bf16 (v6e/v7x fast path)

    # ---- fc1 (+bias) + ReLU: MXU matmul, K = S_pad = 8 ----------------------
    w1 = w1b_ref[0:S_pad, :]                               # tile-aligned rows
    b1 = w1b_ref[S_pad:S_pad + 1, :].astype(jnp.float32)   # bias row
    h = jnp.dot(x_ref[...].astype(mxu_dtype), w1,
                preferred_element_type=jnp.float32)
    h = jnp.maximum(h + b1, 0.0)

    # ---- fc2 (+bias): MXU matmul, K = H = 128, N = action_dim ---------------
    w2 = w2b_ref[0:H, :]                                   # tile-aligned rows
    b2 = w2b_ref[H:H + 1, :].astype(jnp.float32)           # bias row
    out = jnp.dot(h.astype(mxu_dtype), w2, preferred_element_type=jnp.float32)
    o_ref[...] = (out + b2).astype(o_ref.dtype)


def prepare_params(w1, b1, w2, b2, *, mxu_dtype=jnp.float32):
    """One-time slab prep (hoisted out of the per-call path).

    Returns
      w1b: [S_pad + 1, H]  rows = [w1; zero K-padding; b1]
      w2b: [H + 1, A]      rows = [w2; b2]
    Rebuild only when the parameters change (e.g. after an optimizer step).
    """
    S, H = w1.shape
    A = w2.shape[1]
    b1 = jnp.reshape(b1, (1, H)).astype(jnp.float32)
    b2 = jnp.reshape(b2, (1, A)).astype(jnp.float32)

    S_pad = _round_up(S, 8)               # pad fc1 contraction dim for the MXU
    w1b = jnp.zeros((S_pad + 1, H), jnp.float32)
    w1b = w1b.at[:S, :].set(w1)
    w1b = w1b.at[S_pad:S_pad + 1, :].set(b1)
    w2b = jnp.concatenate([w2.astype(jnp.float32), b2], axis=0)   # [H+1, A]
    return w1b.astype(mxu_dtype), w2b.astype(mxu_dtype)


def qnet_forward(x, w1b, w2b, *, block_b=2048):
    """Forward pass of Qnet.  x:[B,S] f32, slabs from prepare_params()."""
    B, S = x.shape
    S_pad = w1b.shape[0] - 1
    H = w1b.shape[1]
    A = w2b.shape[1]
    assert w2b.shape[0] == H + 1 and S_pad >= S

    # Balanced batch tiles: just cover B, force >=2 tiles for mid-size batches
    # so v7x's two TensorCores both get real work ("parallel" axis below).
    num_tiles = pl.cdiv(B, block_b)
    if B >= 16:
        num_tiles = max(num_tiles, 2)
    TB = _round_up(pl.cdiv(B, num_tiles), 8)
    B_pad = num_tiles * TB

    # Single pad op: batch rows up to B_pad, feature cols up to S_pad (zeros,
    # so the padded K columns do not affect fc1; padded rows are sliced off).
    if B_pad != B or S_pad != S:
        x_in = jnp.pad(x, ((0, B_pad - B), (0, S_pad - S)))
    else:
        x_in = x

    flops = 2 * B_pad * (S_pad * H + H * A)
    bytes_accessed = int(4 * x_in.size + w1b.dtype.itemsize * w1b.size
                         + w2b.dtype.itemsize * w2b.size + 4 * B_pad * A)

    # TODO(synk): for action selection / TD targets, fuse the argmax / Q-gather
    # consumer into this kernel (mask padded rows) so Q never leaves VMEM.
    out = pl.pallas_call(
        qnet_kernel,
        out_shape=jax.ShapeDtypeStruct((B_pad, A), jnp.float32),
        grid=(num_tiles,),
        in_specs=[
            pl.BlockSpec((TB, S_pad), lambda i: (i, 0)),        # batch-tiled
            pl.BlockSpec((S_pad + 1, H), lambda i: (0, 0)),     # VMEM-resident
            pl.BlockSpec((H + 1, A), lambda i: (0, 0)),         # VMEM-resident
        ],
        out_specs=pl.BlockSpec((TB, A), lambda i: (i, 0)),      # no lane padding
        compiler_params=pltpu.CompilerParams(
            dimension_semantics=("parallel",),                  # megacore on v7x
            vmem_limit_bytes=32 * 1024 * 1024),
        cost_estimate=pl.CostEstimate(
            flops=flops, transcendentals=0, bytes_accessed=bytes_accessed),
    )(x_in, w1b, w2b)

    return out[:B] if B_pad != B else out


def init_params(key, state_dim, hidden_dim, action_dim):
    """Deterministic init mimicking torch.nn.Linear (uniform +/- 1/sqrt(fan_in)).

    Weights are kept as [in, out] (transpose of torch's [out, in]) so the
    kernel computes x @ W directly.
    """
    k1, k2, k3, k4 = jax.random.split(key, 4)
    bound1 = 1.0 / jnp.sqrt(jnp.float32(state_dim))
    bound2 = 1.0 / jnp.sqrt(jnp.float32(hidden_dim))
    w1 = jax.random.uniform(k1, (state_dim, hidden_dim), jnp.float32,
                            -bound1, bound1)
    b1 = jax.random.uniform(k2, (1, hidden_dim), jnp.float32, -bound1, bound1)
    w2 = jax.random.uniform(k3, (hidden_dim, action_dim), jnp.float32,
                            -bound2, bound2)
    b2 = jax.random.uniform(k4, (1, action_dim), jnp.float32, -bound2, bound2)
    return w1, b1, w2, b2


if __name__ == "__main__":
    # CartPole-v1: state_dim=4, action_dim=2; hidden_dim=128 per the script.
    state_dim = 4
    hidden_dim = 128
    action_dim = 2

    key = jax.random.PRNGKey(0)
    kx, kp, kx2 = jax.random.split(key, 3)
    w1, b1, w2, b2 = init_params(kp, state_dim, hidden_dim, action_dim)

    # One-time slab prep, reused across every forward call below.
    w1b, w2b = prepare_params(w1, b1, w2, b2)

    # Single env-step path (B=2): one 8-row tile.
    x = jax.random.normal(kx, (2, state_dim), jnp.float32)
    out = qnet_forward(x, w1b, w2b)
    jax.block_until_ready(out)
    ref = jnp.maximum(x @ w1 + b1, 0.0) @ w2 + b2
    assert out.shape == (2, action_dim)
    assert jnp.allclose(out, ref, atol=1e-5, rtol=1e-5)

    # Replay-minibatch path: B=600 -> 2 balanced tiles of 304 rows (exercises
    # tile padding, the parallel grid axis, and VMEM-resident weight slabs).
    xb = jax.random.normal(kx2, (600, state_dim), jnp.float32)
    outb = qnet_forward(xb, w1b, w2b)
    jax.block_until_ready(outb)
    refb = jnp.maximum(xb @ w1 + b1, 0.0) @ w2 + b2
    assert outb.shape == (600, action_dim)
    assert jnp.allclose(outb, refb, atol=1e-4, rtol=1e-4)

    # Optional bf16 MXU path (v6e/v7x throughput); execution/shape check only,
    # f32 remains the default to match torch float32 numerics.
    w1b_bf, w2b_bf = prepare_params(w1, b1, w2, b2, mxu_dtype=jnp.bfloat16)
    outb_bf = qnet_forward(xb, w1b_bf, w2b_bf)
    jax.block_until_ready(outb_bf)
    assert outb_bf.shape == (600, action_dim)
    assert bool(jnp.all(jnp.isfinite(outb_bf)))

    print("KERNEL_OK")
</pallas_src>

<mosaic_0001>
module attributes {stable_mosaic.version = 11 : i64} {
  func.func @qnet_kernel(%arg0: i32, %arg1: memref<8x8xf32, #tpu.memory_space<vmem>>, %arg2: memref<9x128xf32, #tpu.memory_space<vmem>>, %arg3: memref<129x2xf32, #tpu.memory_space<vmem>>, %arg4: memref<8x2xf32, #tpu.memory_space<vmem>>) attributes {dimension_semantics = [#tpu.dimension_semantics<parallel>], iteration_bounds = array<i64: 1>, scalar_prefetch = 0 : i64, scratch_operands = 0 : i64, tpu.core_type = #tpu.core_type<tc>, window_params = [{transform_indices = @transform_0, window_bounds = array<i64: 8, 8>}, {pipeline_mode = #tpu.pipeline_mode<synchronous>, transform_indices = @transform_1, window_bounds = array<i64: 9, 128>}, {pipeline_mode = #tpu.pipeline_mode<synchronous>, transform_indices = @transform_2, window_bounds = array<i64: 129, 2>}, {transform_indices = @transform_3, window_bounds = array<i64: 8, 2>}]} {
    %c0 = arith.constant 0 : index
    %c0_0 = arith.constant 0 : index
    %0 = vector.load %arg2[%c0, %c0_0] : memref<9x128xf32, #tpu.memory_space<vmem>>, vector<8x128xf32>
    %c8 = arith.constant 8 : index
    %c0_1 = arith.constant 0 : index
    %1 = vector.load %arg2[%c8, %c0_1] : memref<9x128xf32, #tpu.memory_space<vmem>>, vector<1x128xf32>
    %c0_2 = arith.constant 0 : index
    %c0_3 = arith.constant 0 : index
    %2 = vector.load %arg1[%c0_2, %c0_3] : memref<8x8xf32, #tpu.memory_space<vmem>>, vector<8x8xf32>
    %cst = arith.constant dense<0.000000e+00> : vector<8x128xf32>
    %3 = tpu.matmul %2, %0, %cst {dimension_numbers = #tpu.dot_dimension_numbers<[1], [0], [0], [1], [0, 0, 1, 1], [], []>} : vector<8x8xf32>, vector<8x128xf32>, vector<8x128xf32> -> vector<8x128xf32>
    %4 = vector.broadcast %1 : vector<1x128xf32> to vector<8x128xf32>
    %5 = arith.addf %3, %4 : vector<8x128xf32>
    %cst_4 = arith.constant 0.000000e+00 : f32
    %6 = vector.broadcast %cst_4 : f32 to vector<8x128xf32>
    %7 = arith.maximumf %5, %6 : vector<8x128xf32>
    %c0_5 = arith.constant 0 : index
    %c0_6 = arith.constant 0 : index
    %8 = vector.load %arg3[%c0_5, %c0_6] : memref<129x2xf32, #tpu.memory_space<vmem>>, vector<128x2xf32>
    %c128 = arith.constant 128 : index
    %c0_7 = arith.constant 0 : index
    %9 = vector.load %arg3[%c128, %c0_7] : memref<129x2xf32, #tpu.memory_space<vmem>>, vector<1x2xf32>
    %cst_8 = arith.constant dense<0.000000e+00> : vector<8x2xf32>
    %10 = tpu.matmul %7, %8, %cst_8 {dimension_numbers = #tpu.dot_dimension_numbers<[1], [0], [0], [1], [0, 0, 1, 1], [], []>} : vector<8x128xf32>, vector<128x2xf32>, vector<8x2xf32> -> vector<8x2xf32>
    %11 = vector.broadcast %9 : vector<1x2xf32> to vector<8x2xf32>
    %12 = arith.addf %10, %11 : vector<8x2xf32>
    %c0_9 = arith.constant 0 : index
    %c0_10 = arith.constant 0 : index
    %13 = vector.load %arg4[%c0_9, %c0_10] : memref<8x2xf32, #tpu.memory_space<vmem>>, vector<8x2xf32>
    tpu.vector_store %arg4[%c0_9, %c0_10], %12 {strides = array<i32>} : memref<8x2xf32, #tpu.memory_space<vmem>>, vector<8x2xf32>,
    return
  }
  func.func @transform_0(%arg0: i32) -> (i32, i32) {
    %c0_i32 = arith.constant 0 : i32
    %c0_i32_0 = arith.constant 0 : i32
    return %arg0, %c0_i32 : i32, i32
  }
  func.func @transform_1(%arg0: i32) -> (i32, i32) {
    %c0_i32 = arith.constant 0 : i32
    %c0_i32_0 = arith.constant 0 : i32
    %c0_i32_1 = arith.constant 0 : i32
    return %c0_i32, %c0_i32_0 : i32, i32
  }
  func.func @transform_2(%arg0: i32) -> (i32, i32) {
    %c0_i32 = arith.constant 0 : i32
    %c0_i32_0 = arith.constant 0 : i32
    %c0_i32_1 = arith.constant 0 : i32
    return %c0_i32, %c0_i32_0 : i32, i32
  }
  func.func @transform_3(%arg0: i32) -> (i32, i32) {
    %c0_i32 = arith.constant 0 : i32
    %c0_i32_0 = arith.constant 0 : i32
    return %arg0, %c0_i32 : i32, i32
  }
}

</mosaic_0001>

<llo_original>
// kernel: tpu_custom_call.1
$region0: #{tpu_custom_call.1}
  #allocation0 [shape = 'u32[]', space=smem, size = 0x4, offset = 0x4, fixed_abs, tag = 'smem constant byte address 0x4 - core index']
  #allocation1 [shape = 'u32[144,128]{1,0:T(1,128)}', space=vmem, size = 0x12000, scoped, tag = 'internal scratch']
  %s0 = inlined_call_operand.vmem [shape: f32[8,8], index: 0, kind: input, shape index: {}]
  %s1 = inlined_call_operand.vmem [shape: f32[9,128], index: 1, kind: input, shape index: {}]
  %s2 = inlined_call_operand.vmem [shape: f32[129,2], index: 2, kind: input, shape index: {}]
  %s3 = inlined_call_operand.vmem [shape: f32[8,2], index: 3, kind: output, shape index: {}]
  %s4 = sld [smem:[#allocation0]]
  $region22: #{tpu_custom_call.1} parent=0
    _
  %s6 = ssub.s32 1, %s4
  %s7 = scalar_select 0, %s6, %s4
  // Predicated region
  $region2: #{tpu_custom_call.1} parent=0 // pred_check
    _
  $region3: #{tpu_custom_call.1} parent=0 // pred_check_branch
    %9 = sbr.rel (0) target = $region5
  $region4: #{tpu_custom_call.1} parent=0 // pred_region
    _
  $region5: #{tpu_custom_call.1} parent=0 // pred_fallthru
    _
  // Predicated region
  $region6: #{tpu_custom_call.1} parent=0 // pred_check
    _
  $region7: #{tpu_custom_call.1} parent=0 // pred_check_branch
    %11 = sbr.rel (0) target = $region9
  $region8: #{tpu_custom_call.1} parent=0 // pred_region
    _
  $region9: #{tpu_custom_call.1} parent=0 // pred_fallthru
    _
  // Predicated region
  $region10: #{tpu_custom_call.1} parent=0 // pred_check
    _
  $region11: #{tpu_custom_call.1} parent=0 // pred_check_branch
    %13 = sbr.rel (0) target = $region13
  $region12: #{tpu_custom_call.1} parent=0 // pred_region
    _
  $region13: #{tpu_custom_call.1} parent=0 // pred_fallthru
    _
  %v14 = vld [vmem:[%s1] sm:$0xff]
  %v15 = vld [vmem:[%s1 + $0x8] sm:$0x1]
  %v16 = vld [vmem:[%s0] sm:$0xff]
  %v17 = vlaneseq
  %v18 = vshrl.u32 %v17, 7
  %v19 = vsub.s32 0, %v18
  %v20 = vrot.slane %v15, %v19
  %vm21 = vcmask 64512
  %v23 = vsel %vm21, %v16, 0
  %25 = vmatprep.subr.mxu0 0.0
  %26 = vmatpush1.msra.mxu0 0.0
  %27 = vmatprep.subr.mxu0 0.0
  %28 = vmatpush1.msra.mxu0 0.0
  %29 = vmatprep.subr.mxu0 0.0
  %30 = vmatpush1.msra.mxu0 0.0
  %31 = vmatprep.subr.mxu0 0.0
  %32 = vmatpush1.msra.mxu0 0.0
  %33 = vmatprep.subr.mxu0 0.0
  %34 = vmatpush1.msra.mxu0 0.0
  %35 = vmatprep.subr.mxu0 0.0
  %36 = vmatpush1.msra.mxu0 0.0
  %37 = vmatprep.subr.mxu0 0.0
  %38 = vmatpush1.msra.mxu0 0.0
  %39 = vmatprep.subr.mxu0 0.0
  %40 = vmatpush1.msra.mxu0 0.0
  %41 = vmatprep.subr.mxu0 0.0
  %42 = vmatpush1.msra.mxu0 0.0
  %43 = vmatprep.subr.mxu0 0.0
  %44 = vmatpush1.msra.mxu0 0.0
  %45 = vmatprep.subr.mxu0 0.0
  %46 = vmatpush1.msra.mxu0 0.0
  %47 = vmatprep.subr.mxu0 0.0
  %48 = vmatpush1.msra.mxu0 0.0
  %49 = vmatprep.subr.mxu0 0.0
  %50 = vmatpush1.msra.mxu0 0.0
  %51 = vmatprep.subr.mxu0 0.0
  %52 = vmatpush1.msra.mxu0 0.0
  %53 = vmatprep.subr.mxu0 0.0
  %54 = vmatpush1.msra.mxu0 0.0
  %55 = vmatprep.subr.mxu0 0.0
  %56 = vmatpush1.msra.mxu0 %v14
  %57 = vmatprep.subr.mxu0 0.0
  %58 = vmatpush2.msra.mxu0 0.0
  %59 = vmatprep.subr.mxu0 0.0
  %60 = vmatpush2.msra.mxu0 0.0
  %61 = vmatprep.subr.mxu0 0.0
  %62 = vmatpush2.msra.mxu0 0.0
  %63 = vmatprep.subr.mxu0 0.0
  %64 = vmatpush2.msra.mxu0 0.0
  %65 = vmatprep.subr.mxu0 0.0
  %66 = vmatpush2.msra.mxu0 0.0
  %67 = vmatprep.subr.mxu0 0.0
  %68 = vmatpush2.msra.mxu0 0.0
  %69 = vmatprep.subr.mxu0 0.0
  %70 = vmatpush2.msra.mxu0 0.0
  %71 = vmatprep.subr.mxu0 0.0
  %72 = vmatpush2.msra.mxu0 0.0
  %73 = vmatprep.subr.mxu0 0.0
  %74 = vmatpush2.msra.mxu0 0.0
  %75 = vmatprep.subr.mxu0 0.0
  %76 = vmatpush2.msra.mxu0 0.0
  %77 = vmatprep.subr.mxu0 0.0
  %78 = vmatpush2.msra.mxu0 0.0
  %79 = vmatprep.subr.mxu0 0.0
  %80 = vmatpush2.msra.mxu0 0.0
  %81 = vmatprep.subr.mxu0 0.0
  %82 = vmatpush2.msra.mxu0 0.0
  %83 = vmatprep.subr.mxu0 0.0
  %84 = vmatpush2.msra.mxu0 0.0
  %85 = vmatprep.subr.mxu0 0.0
  %86 = vmatpush2.msra.mxu0 0.0
  %87 = vmatprep.subr.mxu0 0.0
  %88 = vmatpush2.msra.mxu0 0.0
  %89 = vmatprep.mubr.f32.mxu0 0.0
  %90 = vmatmul.mubr.f32.gmra.mxu0 %v23
  %v91 = vpop.f32.mrf.mxu0
  %v92 = vadd.f32 %v20, %v91
  %v93 = vpop.f32.mrf.mxu0
  %94 = vdwg.mxu0
  %v95 = vmax.f32 %v92, 0.0
  %v96 = vld [vmem:[%s2] sm:$0xff]
  %v97 = vld [vmem:[%s2 + $0x8] sm:$0xff]
  %v98 = vld [vmem:[%s2 + $0x10] sm:$0xff]
  %v99 = vld [vmem:[%s2 + $0x18] sm:$0xff]
  %v100 = vld [vmem:[%s2 + $0x20] sm:$0xff]
  %v101 = vld [vmem:[%s2 + $0x28] sm:$0xff]
  %v102 = vld [vmem:[%s2 + $0x30] sm:$0xff]
  %v103 = vld [vmem:[%s2 + $0x38] sm:$0xff]
  %v104 = vld [vmem:[%s2 + $0x40] sm:$0xff]
  %v105 = vld [vmem:[%s2 + $0x48] sm:$0xff]
  %v106 = vld [vmem:[%s2 + $0x50] sm:$0xff]
  %v107 = vld [vmem:[%s2 + $0x58] sm:$0xff]
  %v108 = vld [vmem:[%s2 + $0x60] sm:$0xff]
  %v109 = vld [vmem:[%s2 + $0x68] sm:$0xff]
  %v110 = vld [vmem:[%s2 + $0x70] sm:$0xff]
  %v111 = vld [vmem:[%s2 + $0x78] sm:$0xff]
  %v112 = vld [vmem:[%s2 + $0x80] sm:$0x1]
  %v113 = vlaneseq
  %v114 = vshrl.u32 %v113, 7
  %v115 = vsub.s32 0, %v114
  %v116 = vrot.slane %v112, %v115
  %117 = vmatprep.subr.mxu0 0.0
  %118 = vmatpush1.msra.mxu0 %v111
  %119 = vmatprep.subr.mxu0 0.0
  %120 = vmatpush1.msra.mxu0 %v110
  %121 = vmatprep.subr.mxu0 0.0
  %122 = vmatpush1.msra.mxu0 %v109
  %123 = vmatprep.subr.mxu0 0.0
  %124 = vmatpush1.msra.mxu0 %v108
  %125 = vmatprep.subr.mxu0 0.0
  %126 = vmatpush1.msra.mxu0 %v107
  %127 = vmatprep.subr.mxu0 0.0
  %128 = vmatpush1.msra.mxu0 %v106
  %129 = vmatprep.subr.mxu0 0.0
  %130 = vmatpush1.msra.mxu0 %v105
  %131 = vmatprep.subr.mxu0 0.0
  %132 = vmatpush1.msra.mxu0 %v104
  %133 = vmatprep.subr.mxu0 0.0
  %134 = vmatpush1.msra.mxu0 %v103
  %135 = vmatprep.subr.mxu0 0.0
  %136 = vmatpush1.msra.mxu0 %v102
  %137 = vmatprep.subr.mxu0 0.0
  %138 = vmatpush1.msra.mxu0 %v101
  %139 = vmatprep.subr.mxu0 0.0
  %140 = vmatpush1.msra.mxu0 %v100
  %141 = vmatprep.subr.mxu0 0.0
  %142 = vmatpush1.msra.mxu0 %v99
  %143 = vmatprep.subr.mxu0 0.0
  %144 = vmatpush1.msra.mxu0 %v98
  %145 = vmatprep.subr.mxu0 0.0
  %146 = vmatpush1.msra.mxu0 %v97
  %147 = vmatprep.subr.mxu0 0.0
  %148 = vmatpush1.msra.mxu0 %v96
  %149 = vmatprep.subr.mxu0 0.0
  %150 = vmatpush2.msra.mxu0 0.0
  %151 = vmatprep.subr.mxu0 0.0
  %152 = vmatpush2.msra.mxu0 0.0
  %153 = vmatprep.subr.mxu0 0.0
  %154 = vmatpush2.msra.mxu0 0.0
  %155 = vmatprep.subr.mxu0 0.0
  %156 = vmatpush2.msra.mxu0 0.0
  %157 = vmatprep.subr.mxu0 0.0
  %158 = vmatpush2.msra.mxu0 0.0
  %159 = vmatprep.subr.mxu0 0.0
  %160 = vmatpush2.msra.mxu0 0.0
  %161 = vmatprep.subr.mxu0 0.0
  %162 = vmatpush2.msra.mxu0 0.0
  %163 = vmatprep.subr.mxu0 0.0
  %164 = vmatpush2.msra.mxu0 0.0
  %165 = vmatprep.subr.mxu0 0.0
  %166 = vmatpush2.msra.mxu0 0.0
  %167 = vmatprep.subr.mxu0 0.0
  %168 = vmatpush2.msra.mxu0 0.0
  %169 = vmatprep.subr.mxu0 0.0
  %170 = vmatpush2.msra.mxu0 0.0
  %171 = vmatprep.subr.mxu0 0.0
  %172 = vmatpush2.msra.mxu0 0.0
  %173 = vmatprep.subr.mxu0 0.0
  %174 = vmatpush2.msra.mxu0 0.0
  %175 = vmatprep.subr.mxu0 0.0
  %176 = vmatpush2.msra.mxu0 0.0
  %177 = vmatprep.subr.mxu0 0.0
  %178 = vmatpush2.msra.mxu0 0.0
  %179 = vmatprep.subr.mxu0 0.0
  %180 = vmatpush2.msra.mxu0 0.0
  %181 = vmatprep.mubr.f32.mxu0 0.0
  %182 = vmatmul.mubr.f32.gmra.mxu0 %v95
  %v183 = vpop.f32.mrf.mxu0
  %v184 = vadd.f32 %v116, %v183
  %v185 = vpop.f32.mrf.mxu0
  %186 = vdwg.mxu0
  %vm187 = vcmask 15360
  %188 = vst.msk [vmem:[%s3] sm:$0xff] %vm187, %v184
  // Predicated region
  $region14: #{tpu_custom_call.1} parent=0 // pred_check
    _
  $region15: #{tpu_custom_call.1} parent=0 // pred_check_branch
    %190 = sbr.rel (0) target = $region17
  $region16: #{tpu_custom_call.1} parent=0 // pred_region
    _
  $region17: #{tpu_custom_call.1} parent=0 // pred_fallthru
    _
  // Predicated region
  $region18: #{tpu_custom_call.1} parent=0 // pred_check
    _
  $region19: #{tpu_custom_call.1} parent=0 // pred_check_branch
    %192 = sbr.rel (0) target = $region21
  $region20: #{tpu_custom_call.1} parent=0 // pred_region
    _
  $region21: #{tpu_custom_call.1} parent=0 // pred_fallthru
    _

</llo_original>
